<compile_context>
chip_gen: v5e
topology: v5e:2x2
jax: 0.10.0
libtpu: 0.0.40
codegen_flags: <defaults>
</compile_context>

<pallas_src>
import functools

import jax
import jax.numpy as jnp
from jax.experimental import pallas as pl
from jax.experimental.pallas import tpu as pltpu

LANE = 128


def _round_up(x: int, m: int) -> int:
    return ((x + m - 1) // m) * m


def _pad_to(x, shape):
    pads = [(0, s - d) for d, s in zip(x.shape, shape)]
    return jnp.pad(x, pads)


# ----------------------------------------------------------------------------
# Kernel body: full MLP (input layer + nh hidden layers + fused mu|sigma head)
# on one (block_b, *) batch tile.  All intermediates live in vregs/VMEM.
# ----------------------------------------------------------------------------
def _q_z_yx_kernel(x_ref, w_in_ref, b_in_ref, w_h_ref, b_h_ref,
                   w_head_ref, b_head_ref, out_ref, *, nh: int, dim_out: int):
    bf16 = jnp.bfloat16
    f32 = jnp.float32

    def elu(v):
        # elu(v) = v if v > 0 else exp(v) - 1   (alpha = 1, F.elu default).
        # Clamp the exp argument so the untaken branch never overflows.
        return jnp.where(v > 0, v, jnp.exp(jnp.minimum(v, 0.0)) - 1.0)

    # input layer (bf16 operands on the MXU, f32 accumulation)
    x = x_ref[...].astype(bf16)
    h = jnp.dot(x, w_in_ref[...], preferred_element_type=f32)
    h = elu(h + b_in_ref[...])

    # nh hidden layers (static unroll; weights indexed along leading axis)
    for i in range(nh):
        h = jnp.dot(h.astype(bf16), w_h_ref[i], preferred_element_type=f32)
        h = elu(h + b_h_ref[i])

    # fused head: lanes [0, dim_out) = mu, [dim_out, 2*dim_out) = sigma preact
    y = jnp.dot(h.astype(bf16), w_head_ref[...], preferred_element_type=f32)
    y = y + b_head_ref[...]

    lane = jax.lax.broadcasted_iota(jnp.int32, y.shape, 1)
    is_sigma = (lane >= dim_out) & (lane < 2 * dim_out)
    # numerically stable softplus: max(x, 0) + log1p(exp(-|x|))   (EUP ops)
    softplus = jnp.maximum(y, 0.0) + jnp.log1p(jnp.exp(-jnp.abs(y)))
    out_ref[...] = jnp.where(is_sigma, softplus, y).astype(out_ref.dtype)


# ----------------------------------------------------------------------------
# One-time parameter preprocessing (transpose to (in, out), pad, stack, cast
# weights to bf16).  Call once; reuse the result for every forward call.
# ----------------------------------------------------------------------------
def prepare_params(params, weight_dtype=jnp.bfloat16):
    nh = len(params["w_hidden"])
    dim_h, dim_in = params["w_input"].shape      # nn.Linear layout: (out, in)
    dim_out = params["w_mu"].shape[0]

    dim_in_p = max(8, _round_up(dim_in, 8))      # contraction dim: 8-aligned only
    dim_h_p = _round_up(dim_h, LANE)
    head_p = _round_up(2 * dim_out, LANE)

    f32 = jnp.float32
    w_in = _pad_to(params["w_input"].T.astype(f32), (dim_in_p, dim_h_p))
    b_in = _pad_to(params["b_input"].astype(f32)[None, :], (1, dim_h_p))
    w_h = jnp.stack([_pad_to(w.T.astype(f32), (dim_h_p, dim_h_p))
                     for w in params["w_hidden"]])                      # (nh, H, H)
    b_h = jnp.stack([_pad_to(b.astype(f32)[None, :], (1, dim_h_p))
                     for b in params["b_hidden"]])                      # (nh, 1, H)

    # fused mu|sigma head
    w_head = jnp.concatenate([params["w_mu"].T, params["w_sigma"].T], axis=1)
    b_head = jnp.concatenate([params["b_mu"], params["b_sigma"]], axis=0)
    w_head = _pad_to(w_head.astype(f32), (dim_h_p, head_p))
    b_head = _pad_to(b_head.astype(f32)[None, :], (1, head_p))

    weights = {
        "w_in": w_in.astype(weight_dtype),
        "b_in": b_in,                                   # biases stay f32
        "w_h": w_h.astype(weight_dtype),
        "b_h": b_h,
        "w_head": w_head.astype(weight_dtype),
        "b_head": b_head,
    }
    return {"weights": weights, "dim_out": dim_out}


# ----------------------------------------------------------------------------
# Forward: pad x, build BlockSpecs, single pallas_call over the batch grid.
# ----------------------------------------------------------------------------
@functools.partial(jax.jit, static_argnames=("dim_out",))
def _q_z_yx_forward_impl(xy, weights, *, dim_out: int):
    B = xy.shape[0]
    w_in, b_in = weights["w_in"], weights["b_in"]
    w_h, b_h = weights["w_h"], weights["b_h"]
    w_head, b_head = weights["w_head"], weights["b_head"]

    nh = w_h.shape[0]
    dim_in_p, dim_h_p = w_in.shape
    head_p = w_head.shape[1]

    # Batch tile: large enough to amortize ~0.35 us/step overhead, but keep
    # >= 2 grid blocks when possible so both v7x TensorCores get work
    # (dimension_semantics=("parallel",)).
    block_b = max(8, min(2048, _round_up(pl.cdiv(B, 2), 8)))
    padded_B = _round_up(B, block_b)
    n_blocks = padded_B // block_b

    x_p = _pad_to(xy.astype(jnp.float32), (padded_B, dim_in_p))

    # Resident (DMA'd once) specs: index_map returns block 0 every grid step.
    def resident(shape):
        return pl.BlockSpec(shape, lambda b: (0,) * len(shape))

    out = pl.pallas_call(
        functools.partial(_q_z_yx_kernel, nh=nh, dim_out=dim_out),
        grid=(n_blocks,),
        in_specs=[
            pl.BlockSpec((block_b, dim_in_p), lambda b: (b, 0)),   # x (batch-tiled)
            resident((dim_in_p, dim_h_p)),                         # w_in
            resident((1, dim_h_p)),                                # b_in
            resident((nh, dim_h_p, dim_h_p)),                      # w_h (stacked)
            resident((nh, 1, dim_h_p)),                            # b_h (stacked)
            resident((dim_h_p, head_p)),                           # w_mu|w_sigma
            resident((1, head_p)),                                 # b_mu|b_sigma
        ],
        out_specs=pl.BlockSpec((block_b, head_p), lambda b: (b, 0)),
        out_shape=jax.ShapeDtypeStruct((padded_B, head_p), xy.dtype),
        compiler_params=pltpu.CompilerParams(
            dimension_semantics=("parallel",),   # shard batch across TCs (v7x)
        ),
    )(x_p, w_in, b_in, w_h, b_h, w_head, b_head)

    mu = out[:B, :dim_out]
    sigma = out[:B, dim_out:2 * dim_out]
    return mu, sigma


def q_z_yx_forward(xy, prepared):
    """xy: (B, dim_in).  prepared = prepare_params(torch-style params)."""
    return _q_z_yx_forward_impl(xy, prepared["weights"], dim_out=prepared["dim_out"])


# ----------------------------------------------------------------------------
# Pure-JAX reference (mirrors the PyTorch module) + parameter init.
# ----------------------------------------------------------------------------
def q_z_yx_reference(xy, params):
    x = jax.nn.elu(xy @ params["w_input"].T + params["b_input"])
    for w, b in zip(params["w_hidden"], params["b_hidden"]):
        x = jax.nn.elu(x @ w.T + b)
    mu = x @ params["w_mu"].T + params["b_mu"]
    sigma = jax.nn.softplus(x @ params["w_sigma"].T + params["b_sigma"])
    return mu, sigma


def init_params(key, dim_in, nh, dim_h, dim_out):
    ks = jax.random.split(key, 2 * (nh + 3))
    ki = iter(range(len(ks)))

    def linear(k_w, k_b, fan_in, fan_out):
        bound = 1.0 / jnp.sqrt(fan_in)
        w = jax.random.uniform(k_w, (fan_out, fan_in), jnp.float32, -bound, bound)
        b = jax.random.uniform(k_b, (fan_out,), jnp.float32, -bound, bound)
        return w, b

    w_in, b_in = linear(ks[next(ki)], ks[next(ki)], dim_in, dim_h)
    w_h, b_h = [], []
    for _ in range(nh):
        w, b = linear(ks[next(ki)], ks[next(ki)], dim_h, dim_h)
        w_h.append(w); b_h.append(b)
    w_mu, b_mu = linear(ks[next(ki)], ks[next(ki)], dim_h, dim_out)
    w_sg, b_sg = linear(ks[next(ki)], ks[next(ki)], dim_h, dim_out)
    return dict(w_input=w_in, b_input=b_in, w_hidden=w_h, b_hidden=b_h,
                w_mu=w_mu, b_mu=b_mu, w_sigma=w_sg, b_sigma=b_sg)


if __name__ == "__main__":
    # Module defaults: dim_in = 25 + 1, nh = 3, dim_h = 20, dim_out = 20.
    dim_in, nh, dim_h, dim_out = 26, 3, 20, 20

    key = jax.random.PRNGKey(0)
    k_x, k_x2, k_p = jax.random.split(key, 3)
    params = init_params(k_p, dim_in, nh, dim_h, dim_out)
    prepared = prepare_params(params)   # one-time weight preprocessing

    # bf16 matmul operands with f32 accumulation -> slightly looser tolerance.
    TOL = dict(atol=2e-2, rtol=2e-2)

    # Small test (single grid block).
    xy = jax.random.normal(k_x, (8, dim_in), jnp.float32)
    mu, sigma = q_z_yx_forward(xy, prepared)
    jax.block_until_ready((mu, sigma))
    mu_ref, sigma_ref = q_z_yx_reference(xy, params)
    assert mu.shape == (8, dim_out) and sigma.shape == (8, dim_out)
    assert jnp.allclose(mu, mu_ref, **TOL), "mu mismatch (B=8)"
    assert jnp.allclose(sigma, sigma_ref, **TOL), "sigma mismatch (B=8)"
    assert bool(jnp.all(sigma > 0)), "sigma must be positive (B=8)"

    # Slightly larger test: exercises the multi-block grid + batch padding.
    xy2 = jax.random.normal(k_x2, (200, dim_in), jnp.float32)
    mu2, sigma2 = q_z_yx_forward(xy2, prepared)
    jax.block_until_ready((mu2, sigma2))
    mu2_ref, sigma2_ref = q_z_yx_reference(xy2, params)
    assert jnp.allclose(mu2, mu2_ref, **TOL), "mu mismatch (B=200)"
    assert jnp.allclose(sigma2, sigma2_ref, **TOL), "sigma mismatch (B=200)"
    assert bool(jnp.all(sigma2 > 0)), "sigma must be positive (B=200)"

    print("KERNEL_OK")
</pallas_src>

<mosaic_0001>
module attributes {stable_mosaic.version = 11 : i64} {
  func.func @_q_z_yx_kernel(%arg0: i32, %arg1: memref<8x32xf32, #tpu.memory_space<vmem>>, %arg2: memref<32x128xbf16, #tpu.memory_space<vmem>>, %arg3: memref<1x128xf32, #tpu.memory_space<vmem>>, %arg4: memref<3x128x128xbf16, #tpu.memory_space<vmem>>, %arg5: memref<3x1x128xf32, #tpu.memory_space<vmem>>, %arg6: memref<128x128xbf16, #tpu.memory_space<vmem>>, %arg7: memref<1x128xf32, #tpu.memory_space<vmem>>, %arg8: memref<8x128xf32, #tpu.memory_space<vmem>>) attributes {dimension_semantics = [#tpu.dimension_semantics<parallel>], iteration_bounds = array<i64: 1>, scalar_prefetch = 0 : i64, scratch_operands = 0 : i64, tpu.core_type = #tpu.core_type<tc>, window_params = [{transform_indices = @transform_0, window_bounds = array<i64: 8, 32>}, {pipeline_mode = #tpu.pipeline_mode<synchronous>, transform_indices = @transform_1, window_bounds = array<i64: 32, 128>}, {pipeline_mode = #tpu.pipeline_mode<synchronous>, transform_indices = @transform_2, window_bounds = array<i64: 1, 128>}, {pipeline_mode = #tpu.pipeline_mode<synchronous>, transform_indices = @transform_3, window_bounds = array<i64: 3, 128, 128>}, {pipeline_mode = #tpu.pipeline_mode<synchronous>, transform_indices = @transform_4, window_bounds = array<i64: 3, 1, 128>}, {pipeline_mode = #tpu.pipeline_mode<synchronous>, transform_indices = @transform_5, window_bounds = array<i64: 128, 128>}, {pipeline_mode = #tpu.pipeline_mode<synchronous>, transform_indices = @transform_6, window_bounds = array<i64: 1, 128>}, {transform_indices = @transform_7, window_bounds = array<i64: 8, 128>}]} {
    %c0 = arith.constant 0 : index
    %c0_0 = arith.constant 0 : index
    %0 = vector.load %arg1[%c0, %c0_0] : memref<8x32xf32, #tpu.memory_space<vmem>>, vector<8x32xf32>
    %1 = arith.truncf %0 : vector<8x32xf32> to vector<8x32xbf16>
    %c0_1 = arith.constant 0 : index
    %c0_2 = arith.constant 0 : index
    %2 = vector.load %arg2[%c0_1, %c0_2] : memref<32x128xbf16, #tpu.memory_space<vmem>>, vector<32x128xbf16>
    %cst = arith.constant dense<0.000000e+00> : vector<8x128xf32>
    %3 = tpu.matmul %1, %2, %cst {dimension_numbers = #tpu.dot_dimension_numbers<[1], [0], [0], [1], [0, 0, 1, 1], [], []>} : vector<8x32xbf16>, vector<32x128xbf16>, vector<8x128xf32> -> vector<8x128xf32>
    %c0_3 = arith.constant 0 : index
    %c0_4 = arith.constant 0 : index
    %4 = vector.load %arg3[%c0_3, %c0_4] : memref<1x128xf32, #tpu.memory_space<vmem>>, vector<1x128xf32>
    %5 = vector.broadcast %4 : vector<1x128xf32> to vector<8x128xf32>
    %6 = arith.addf %3, %5 : vector<8x128xf32>
    %cst_5 = arith.constant 0.000000e+00 : f32
    %7 = vector.broadcast %cst_5 : f32 to vector<8x128xf32>
    %8 = arith.cmpf ogt, %6, %7 : vector<8x128xf32>
    %cst_6 = arith.constant 0.000000e+00 : f32
    %9 = vector.broadcast %cst_6 : f32 to vector<8x128xf32>
    %10 = arith.minimumf %6, %9 : vector<8x128xf32>
    %11 = math.exp %10 : vector<8x128xf32>
    %cst_7 = arith.constant 1.000000e+00 : f32
    %12 = vector.broadcast %cst_7 : f32 to vector<8x128xf32>
    %13 = arith.subf %11, %12 : vector<8x128xf32>
    %14 = arith.select %8, %6, %13 : vector<8x128xi1>, vector<8x128xf32>
    %15 = arith.truncf %14 : vector<8x128xf32> to vector<8x128xbf16>
    %c0_8 = arith.constant 0 : index
    %c0_9 = arith.constant 0 : index
    %c0_10 = arith.constant 0 : index
    %16 = vector.load %arg4[%c0_8, %c0_9, %c0_10] : memref<3x128x128xbf16, #tpu.memory_space<vmem>>, vector<1x128x128xbf16>
    %17 = vector.shape_cast %16 : vector<1x128x128xbf16> to vector<128x128xbf16>
    %cst_11 = arith.constant dense<0.000000e+00> : vector<8x128xf32>
    %18 = tpu.matmul %15, %17, %cst_11 {dimension_numbers = #tpu.dot_dimension_numbers<[1], [0], [0], [1], [0, 0, 1, 1], [], []>} : vector<8x128xbf16>, vector<128x128xbf16>, vector<8x128xf32> -> vector<8x128xf32>
    %c0_12 = arith.constant 0 : index
    %c0_13 = arith.constant 0 : index
    %c0_14 = arith.constant 0 : index
    %19 = vector.load %arg5[%c0_12, %c0_13, %c0_14] : memref<3x1x128xf32, #tpu.memory_space<vmem>>, vector<1x1x128xf32>
    %20 = vector.shape_cast %19 : vector<1x1x128xf32> to vector<1x128xf32>
    %21 = vector.broadcast %20 : vector<1x128xf32> to vector<8x128xf32>
    %22 = arith.addf %18, %21 : vector<8x128xf32>
    %cst_15 = arith.constant 0.000000e+00 : f32
    %23 = vector.broadcast %cst_15 : f32 to vector<8x128xf32>
    %24 = arith.cmpf ogt, %22, %23 : vector<8x128xf32>
    %cst_16 = arith.constant 0.000000e+00 : f32
    %25 = vector.broadcast %cst_16 : f32 to vector<8x128xf32>
    %26 = arith.minimumf %22, %25 : vector<8x128xf32>
    %27 = math.exp %26 : vector<8x128xf32>
    %cst_17 = arith.constant 1.000000e+00 : f32
    %28 = vector.broadcast %cst_17 : f32 to vector<8x128xf32>
    %29 = arith.subf %27, %28 : vector<8x128xf32>
    %30 = arith.select %24, %22, %29 : vector<8x128xi1>, vector<8x128xf32>
    %31 = arith.truncf %30 : vector<8x128xf32> to vector<8x128xbf16>
    %c1 = arith.constant 1 : index
    %c0_18 = arith.constant 0 : index
    %c0_19 = arith.constant 0 : index
    %32 = vector.load %arg4[%c1, %c0_18, %c0_19] : memref<3x128x128xbf16, #tpu.memory_space<vmem>>, vector<1x128x128xbf16>
    %33 = vector.shape_cast %32 : vector<1x128x128xbf16> to vector<128x128xbf16>
    %cst_20 = arith.constant dense<0.000000e+00> : vector<8x128xf32>
    %34 = tpu.matmul %31, %33, %cst_20 {dimension_numbers = #tpu.dot_dimension_numbers<[1], [0], [0], [1], [0, 0, 1, 1], [], []>} : vector<8x128xbf16>, vector<128x128xbf16>, vector<8x128xf32> -> vector<8x128xf32>
    %c1_21 = arith.constant 1 : index
    %c0_22 = arith.constant 0 : index
    %c0_23 = arith.constant 0 : index
    %35 = vector.load %arg5[%c1_21, %c0_22, %c0_23] : memref<3x1x128xf32, #tpu.memory_space<vmem>>, vector<1x1x128xf32>
    %36 = vector.shape_cast %35 : vector<1x1x128xf32> to vector<1x128xf32>
    %37 = vector.broadcast %36 : vector<1x128xf32> to vector<8x128xf32>
    %38 = arith.addf %34, %37 : vector<8x128xf32>
    %cst_24 = arith.constant 0.000000e+00 : f32
    %39 = vector.broadcast %cst_24 : f32 to vector<8x128xf32>
    %40 = arith.cmpf ogt, %38, %39 : vector<8x128xf32>
    %cst_25 = arith.constant 0.000000e+00 : f32
    %41 = vector.broadcast %cst_25 : f32 to vector<8x128xf32>
    %42 = arith.minimumf %38, %41 : vector<8x128xf32>
    %43 = math.exp %42 : vector<8x128xf32>
    %cst_26 = arith.constant 1.000000e+00 : f32
    %44 = vector.broadcast %cst_26 : f32 to vector<8x128xf32>
    %45 = arith.subf %43, %44 : vector<8x128xf32>
    %46 = arith.select %40, %38, %45 : vector<8x128xi1>, vector<8x128xf32>
    %47 = arith.truncf %46 : vector<8x128xf32> to vector<8x128xbf16>
    %c2 = arith.constant 2 : index
    %c0_27 = arith.constant 0 : index
    %c0_28 = arith.constant 0 : index
    %48 = vector.load %arg4[%c2, %c0_27, %c0_28] : memref<3x128x128xbf16, #tpu.memory_space<vmem>>, vector<1x128x128xbf16>
    %49 = vector.shape_cast %48 : vector<1x128x128xbf16> to vector<128x128xbf16>
    %cst_29 = arith.constant dense<0.000000e+00> : vector<8x128xf32>
    %50 = tpu.matmul %47, %49, %cst_29 {dimension_numbers = #tpu.dot_dimension_numbers<[1], [0], [0], [1], [0, 0, 1, 1], [], []>} : vector<8x128xbf16>, vector<128x128xbf16>, vector<8x128xf32> -> vector<8x128xf32>
    %c2_30 = arith.constant 2 : index
    %c0_31 = arith.constant 0 : index
    %c0_32 = arith.constant 0 : index
    %51 = vector.load %arg5[%c2_30, %c0_31, %c0_32] : memref<3x1x128xf32, #tpu.memory_space<vmem>>, vector<1x1x128xf32>
    %52 = vector.shape_cast %51 : vector<1x1x128xf32> to vector<1x128xf32>
    %53 = vector.broadcast %52 : vector<1x128xf32> to vector<8x128xf32>
    %54 = arith.addf %50, %53 : vector<8x128xf32>
    %cst_33 = arith.constant 0.000000e+00 : f32
    %55 = vector.broadcast %cst_33 : f32 to vector<8x128xf32>
    %56 = arith.cmpf ogt, %54, %55 : vector<8x128xf32>
    %cst_34 = arith.constant 0.000000e+00 : f32
    %57 = vector.broadcast %cst_34 : f32 to vector<8x128xf32>
    %58 = arith.minimumf %54, %57 : vector<8x128xf32>
    %59 = math.exp %58 : vector<8x128xf32>
    %cst_35 = arith.constant 1.000000e+00 : f32
    %60 = vector.broadcast %cst_35 : f32 to vector<8x128xf32>
    %61 = arith.subf %59, %60 : vector<8x128xf32>
    %62 = arith.select %56, %54, %61 : vector<8x128xi1>, vector<8x128xf32>
    %63 = arith.truncf %62 : vector<8x128xf32> to vector<8x128xbf16>
    %c0_36 = arith.constant 0 : index
    %c0_37 = arith.constant 0 : index
    %64 = vector.load %arg6[%c0_36, %c0_37] : memref<128x128xbf16, #tpu.memory_space<vmem>>, vector<128x128xbf16>
    %cst_38 = arith.constant dense<0.000000e+00> : vector<8x128xf32>
    %65 = tpu.matmul %63, %64, %cst_38 {dimension_numbers = #tpu.dot_dimension_numbers<[1], [0], [0], [1], [0, 0, 1, 1], [], []>} : vector<8x128xbf16>, vector<128x128xbf16>, vector<8x128xf32> -> vector<8x128xf32>
    %c0_39 = arith.constant 0 : index
    %c0_40 = arith.constant 0 : index
    %66 = vector.load %arg7[%c0_39, %c0_40] : memref<1x128xf32, #tpu.memory_space<vmem>>, vector<1x128xf32>
    %67 = vector.broadcast %66 : vector<1x128xf32> to vector<8x128xf32>
    %68 = arith.addf %65, %67 : vector<8x128xf32>
    %69 = tpu.iota {dimensions = array<i32: 1>} : vector<8x128xi32>
    %c20_i32 = arith.constant 20 : i32
    %70 = vector.broadcast %c20_i32 : i32 to vector<8x128xi32>
    %71 = arith.cmpi sge, %69, %70 : vector<8x128xi32>
    %c40_i32 = arith.constant 40 : i32
    %72 = vector.broadcast %c40_i32 : i32 to vector<8x128xi32>
    %73 = arith.cmpi slt, %69, %72 : vector<8x128xi32>
    %74 = arith.andi %71, %73 : vector<8x128xi1>
    %cst_41 = arith.constant 0.000000e+00 : f32
    %75 = vector.broadcast %cst_41 : f32 to vector<8x128xf32>
    %76 = arith.maximumf %68, %75 : vector<8x128xf32>
    %77 = math.absf %68 : vector<8x128xf32>
    %cst_42 = arith.constant 0.000000e+00 : f32
    %78 = vector.broadcast %cst_42 : f32 to vector<8x128xf32>
    %79 = arith.subf %78, %77 : vector<8x128xf32>
    %80 = math.exp %79 : vector<8x128xf32>
    %81 = math.log1p %80 : vector<8x128xf32>
    %82 = arith.addf %76, %81 : vector<8x128xf32>
    %83 = arith.select %74, %82, %68 : vector<8x128xi1>, vector<8x128xf32>
    %c0_43 = arith.constant 0 : index
    %c0_44 = arith.constant 0 : index
    %84 = vector.load %arg8[%c0_43, %c0_44] : memref<8x128xf32, #tpu.memory_space<vmem>>, vector<8x128xf32>
    tpu.vector_store %arg8[%c0_43, %c0_44], %83 {strides = array<i32>} : memref<8x128xf32, #tpu.memory_space<vmem>>, vector<8x128xf32>,
    return
  }
  func.func @transform_0(%arg0: i32) -> (i32, i32) {
    %c0_i32 = arith.constant 0 : i32
    %c0_i32_0 = arith.constant 0 : i32
    return %arg0, %c0_i32 : i32, i32
  }
  func.func @transform_1(%arg0: i32) -> (i32, i32) {
    %c0_i32 = arith.constant 0 : i32
    %c0_i32_0 = arith.constant 0 : i32
    %c0_i32_1 = arith.constant 0 : i32
    return %c0_i32, %c0_i32_0 : i32, i32
  }
  func.func @transform_2(%arg0: i32) -> (i32, i32) {
    %c0_i32 = arith.constant 0 : i32
    %c0_i32_0 = arith.constant 0 : i32
    %c0_i32_1 = arith.constant 0 : i32
    return %c0_i32, %c0_i32_0 : i32, i32
  }
  func.func @transform_3(%arg0: i32) -> (i32, i32, i32) {
    %c0_i32 = arith.constant 0 : i32
    %c0_i32_0 = arith.constant 0 : i32
    %c0_i32_1 = arith.constant 0 : i32
    %c0_i32_2 = arith.constant 0 : i32
    return %c0_i32, %c0_i32_0, %c0_i32_1 : i32, i32, i32
  }
  func.func @transform_4(%arg0: i32) -> (i32, i32, i32) {
    %c0_i32 = arith.constant 0 : i32
    %c0_i32_0 = arith.constant 0 : i32
    %c0_i32_1 = arith.constant 0 : i32
    %c0_i32_2 = arith.constant 0 : i32
    return %c0_i32, %c0_i32_0, %c0_i32_1 : i32, i32, i32
  }
  func.func @transform_5(%arg0: i32) -> (i32, i32) {
    %c0_i32 = arith.constant 0 : i32
    %c0_i32_0 = arith.constant 0 : i32
    %c0_i32_1 = arith.constant 0 : i32
    return %c0_i32, %c0_i32_0 : i32, i32
  }
  func.func @transform_6(%arg0: i32) -> (i32, i32) {
    %c0_i32 = arith.constant 0 : i32
    %c0_i32_0 = arith.constant 0 : i32
    %c0_i32_1 = arith.constant 0 : i32
    return %c0_i32, %c0_i32_0 : i32, i32
  }
  func.func @transform_7(%arg0: i32) -> (i32, i32) {
    %c0_i32 = arith.constant 0 : i32
    %c0_i32_0 = arith.constant 0 : i32
    return %arg0, %c0_i32 : i32, i32
  }
}

</mosaic_0001>

<llo_original>
// kernel: _q_z_yx_forward_impl.1
$region0: #{_q_z_yx_forward_impl.1}
  #allocation0 [shape = 'u32[]', space=smem, size = 0x4, offset = 0x4, fixed_abs, tag = 'smem constant byte address 0x4 - core index']
  #allocation1 [shape = 'u32[72,128]{1,0:T(1,128)}', space=vmem, size = 0x9000, scoped, tag = 'internal scratch']
  %s0 = inlined_call_operand.vmem [shape: f32[8,32], index: 0, kind: input, shape index: {}]
  %s1 = inlined_call_operand.vmem [shape: bf16[32,128], index: 1, kind: input, shape index: {}]
  %s2 = inlined_call_operand.vmem [shape: f32[1,128], index: 2, kind: input, shape index: {}]
  %s3 = inlined_call_operand.hbm [shape: bf16[3,128,128], index: 3, kind: input, shape index: {}]
  %s4 = inlined_call_operand.vmem [shape: f32[3,1,128], index: 4, kind: input, shape index: {}]
  %s5 = inlined_call_operand.hbm [shape: bf16[128,128], index: 5, kind: input, shape index: {}]
  %s6 = inlined_call_operand.vmem [shape: f32[1,128], index: 6, kind: input, shape index: {}]
  %s7 = inlined_call_operand.vmem [shape: f32[8,128], index: 7, kind: output, shape index: {}]
  %s8 = sld [smem:[#allocation0]]
  $region46: #{_q_z_yx_forward_impl.1} parent=0
    _
  %s10 = ssub.s32 1, %s8
  %s11 = scalar_select 0, %s10, %s8
  $region1: #{_q_z_yx_forward_impl.1} parent=0
    #allocation2 [shape = 'u8[98304]{0}', space=vmem, size = 0x18000, scoped, tag = 'input window, operand 3, single buffered']
    #allocation3 [shape = 's32[1]{0}', space=sflag, size = 0x4, scoped, tag = 'scoped memory for _q_z_yx_forward_impl.1']
    #allocation4 [shape = 'u8[32768]{0}', space=vmem, size = 0x8000, scoped, tag = 'input window, operand 5, single buffered']
    #allocation5 [shape = 's32[1]{0}', space=sflag, size = 0x4, scoped, tag = 'scoped memory for _q_z_yx_forward_impl.1']
    %12 = vsyncpa [#allocation3], 0
    %13 = vsyncpa [#allocation5], 0
    // Predicated region
    $region2: #{_q_z_yx_forward_impl.1} parent=1 // pred_check
      _
    $region3: #{_q_z_yx_forward_impl.1} parent=1 // pred_check_branch
      %15 = sbr.rel (0) target = $region5
    $region4: #{_q_z_yx_forward_impl.1} parent=1 // pred_region
      _
    $region5: #{_q_z_yx_forward_impl.1} parent=1 // pred_fallthru
      _
    // Predicated region
    $region6: #{_q_z_yx_forward_impl.1} parent=1 // pred_check
      _
    $region7: #{_q_z_yx_forward_impl.1} parent=1 // pred_check_branch
      %17 = sbr.rel (0) target = $region9
    $region8: #{_q_z_yx_forward_impl.1} parent=1 // pred_region
      _
    $region9: #{_q_z_yx_forward_impl.1} parent=1 // pred_fallthru
      _
    // Predicated region
    $region10: #{_q_z_yx_forward_impl.1} parent=1 // pred_check
      _
    $region11: #{_q_z_yx_forward_impl.1} parent=1 // pred_check_branch
      %19 = sbr.rel (0) target = $region13
    $region12: #{_q_z_yx_forward_impl.1} parent=1 // pred_region
      _
    $region13: #{_q_z_yx_forward_impl.1} parent=1 // pred_fallthru
      _
    // Predicated region
    $region14: #{_q_z_yx_forward_impl.1} parent=1 // pred_check
      _
    $region15: #{_q_z_yx_forward_impl.1} parent=1 // pred_check_branch
      %21 = sbr.rel (0) target = $region17
    $region16: #{_q_z_yx_forward_impl.1} parent=1 // pred_region
      %23 = vsyncadd [#allocation3], 0
      %s24 = sshll.u32 %s3, 4
      %s25 = int_to_ptr.hbm [resolvable:$true] %s24
      %s26 = sshll.u32 [#allocation2], 4
      %s27 = int_to_ptr.vmem [resolvable:$true] %s26
      %32 = dma.hbm_to_vmem [thread:$0]  %s25, 3072, %s27, [#allocation3], 64, 64, 4
    $region17: #{_q_z_yx_forward_impl.1} parent=1 // pred_fallthru
      _
    // Predicated region
    $region18: #{_q_z_yx_forward_impl.1} parent=1 // pred_check
      _
    $region19: #{_q_z_yx_forward_impl.1} parent=1 // pred_check_branch
      %34 = sbr.rel (0) target = $region21
    $region20: #{_q_z_yx_forward_impl.1} parent=1 // pred_region
      _
    $region21: #{_q_z_yx_forward_impl.1} parent=1 // pred_fallthru
      _
    // Predicated region
    $region22: #{_q_z_yx_forward_impl.1} parent=1 // pred_check
      _
    $region23: #{_q_z_yx_forward_impl.1} parent=1 // pred_check_branch
      %36 = sbr.rel (0) target = $region25
    $region24: #{_q_z_yx_forward_impl.1} parent=1 // pred_region
      %38 = vsyncadd [#allocation5], 0
      %s39 = sshll.u32 %s5, 4
      %s40 = int_to_ptr.hbm [resolvable:$true] %s39
      %s41 = sshll.u32 [#allocation4], 4
      %s42 = int_to_ptr.vmem [resolvable:$true] %s41
      %47 = dma.hbm_to_vmem [thread:$0]  %s40, 1024, %s42, [#allocation5], 64, 64, 4
    $region25: #{_q_z_yx_forward_impl.1} parent=1 // pred_fallthru
      _
    // Predicated region
    $region26: #{_q_z_yx_forward_impl.1} parent=1 // pred_check
      _
    $region27: #{_q_z_yx_forward_impl.1} parent=1 // pred_check_branch
      %49 = sbr.rel (0) target = $region29
    $region28: #{_q_z_yx_forward_impl.1} parent=1 // pred_region
      _
    $region29: #{_q_z_yx_forward_impl.1} parent=1 // pred_fallthru
      _
    // Predicated region
    $region30: #{_q_z_yx_forward_impl.1} parent=1 // pred_check
      _
    $region31: #{_q_z_yx_forward_impl.1} parent=1 // pred_check_branch
      %51 = sbr.rel (0) target = $region33
    $region32: #{_q_z_yx_forward_impl.1} parent=1 // pred_region
      %53 = dma.done [#allocation3], 3072
    $region33: #{_q_z_yx_forward_impl.1} parent=1 // pred_fallthru
      _
    // Predicated region
    $region34: #{_q_z_yx_forward_impl.1} parent=1 // pred_check
      _
    $region35: #{_q_z_yx_forward_impl.1} parent=1 // pred_check_branch
      %55 = sbr.rel (0) target = $region37
    $region36: #{_q_z_yx_forward_impl.1} parent=1 // pred_region
      %57 = dma.done [#allocation5], 1024
    $region37: #{_q_z_yx_forward_impl.1} parent=1 // pred_fallthru
      _
    %v59 = vld [vmem:[%s0] sm:$0xff]
    %v60 = vpack.c.bf16 %v59, %v59
    %v61 = vld [vmem:[%s1] sm:$0xf]
    %v62 = vld [vmem:[%s1 + $0x4] sm:$0xf]
    %v63 = vld [vmem:[%s1 + $0x8] sm:$0xf]
    %v64 = vld [vmem:[%s1 + $0xc] sm:$0xf]
    %v65 = vld [vmem:[%s2] sm:$0x1]
    %v67 = vperm.slane %v65, 0
    %v73 = vunpack.c.l.b16 %v61
    %v74 = vunpack.c.l.b16 %v62
    %v75 = vunpack.c.l.b16 %v63
    %v76 = vunpack.c.l.b16 %v64
    %v77 = vpack.c.b16 %v74, %v73
    %v78 = vpack.c.b16 %v76, %v75
    %vm81 = vcmask 261120
    %v83 = vsel %vm81, %v60, 0
    %85 = vmatpush.bf16.msra.mxu0 0
    %86 = vmatpush.bf16.msra.mxu0 0
    %87 = vmatpush.bf16.msra.mxu0 0
    %88 = vmatpush.bf16.msra.mxu0 0
    %89 = vmatpush.bf16.msra.mxu0 0
    %90 = vmatpush.bf16.msra.mxu0 0
    %91 = vmatpush.bf16.msra.mxu0 %v78
    %92 = vmatpush.bf16.msra.mxu0 %v77
    %93 = vmatmul.bf16.gmra.mxu0 %v83
    %v94 = vpop.f32.mrf.mxu0
    %v95 = vadd.f32 %v67, %v94
    %v96 = vpop.f32.mrf.mxu0
    %97 = vdwg.mxu0
    %vm98 = vcmp.gt.f32.partialorder %v95, 0.0
    %v99 = vmin.f32 %v95, 0.0
    %v100 = vmul.f32 %v99, 1.442695
    %v101 = vpow.pop %v100
    %v102 = vsub.f32 %v101, 1.0
    %v103 = vsel %vm98, %v95, %v102
    %v104 = vpack.c.bf16 %v103, %v103
    %v105 = vld [vmem:[#allocation2] sm:$0xf]
    %v106 = vld [vmem:[#allocation2 + $0x4] sm:$0xf]
    %v107 = vld [vmem:[#allocation2 + $0x8] sm:$0xf]
    %v108 = vld [vmem:[#allocation2 + $0xc] sm:$0xf]
    %v109 = vld [vmem:[#allocation2 + $0x10] sm:$0xf]
    %v110 = vld [vmem:[#allocation2 + $0x14] sm:$0xf]
    %v111 = vld [vmem:[#allocation2 + $0x18] sm:$0xf]
    %v112 = vld [vmem:[#allocation2 + $0x1c] sm:$0xf]
    %v113 = vld [vmem:[#allocation2 + $0x20] sm:$0xf]
    %v114 = vld [vmem:[#allocation2 + $0x24] sm:$0xf]
    %v115 = vld [vmem:[#allocation2 + $0x28] sm:$0xf]
    %v116 = vld [vmem:[#allocation2 + $0x2c] sm:$0xf]
    %v117 = vld [vmem:[#allocation2 + $0x30] sm:$0xf]
    %v118 = vld [vmem:[#allocation2 + $0x34] sm:$0xf]
    %v119 = vld [vmem:[#allocation2 + $0x38] sm:$0xf]
    %v120 = vld [vmem:[#allocation2 + $0x3c] sm:$0xf]
    %v121 = vld [vmem:[%s4] sm:$0x1]
    %v123 = vperm.slane %v121, 0
    %v141 = vunpack.c.l.b16 %v105
    %v142 = vunpack.c.l.b16 %v106
    %v143 = vunpack.c.l.b16 %v107
    %v144 = vunpack.c.l.b16 %v108
    %v145 = vunpack.c.l.b16 %v109
    %v146 = vunpack.c.l.b16 %v110
    %v147 = vunpack.c.l.b16 %v111
    %v148 = vunpack.c.l.b16 %v112
    %v149 = vunpack.c.l.b16 %v113
    %v150 = vunpack.c.l.b16 %v114
    %v151 = vunpack.c.l.b16 %v115
    %v152 = vunpack.c.l.b16 %v116
    %v153 = vunpack.c.l.b16 %v117
    %v154 = vunpack.c.l.b16 %v118
    %v155 = vunpack.c.l.b16 %v119
    %v156 = vunpack.c.l.b16 %v120
    %v157 = vpack.c.b16 %v142, %v141
    %v158 = vpack.c.b16 %v144, %v143
    %v159 = vpack.c.b16 %v146, %v145
    %v160 = vpack.c.b16 %v148, %v147
    %v161 = vpack.c.b16 %v150, %v149
    %v162 = vpack.c.b16 %v152, %v151
    %v163 = vpack.c.b16 %v154, %v153
    %v164 = vpack.c.b16 %v156, %v155
    %173 = vmatpush.bf16.msra.mxu0 %v164
    %174 = vmatpush.bf16.msra.mxu0 %v163
    %175 = vmatpush.bf16.msra.mxu0 %v162
    %176 = vmatpush.bf16.msra.mxu0 %v161
    %177 = vmatpush.bf16.msra.mxu0 %v160
    %178 = vmatpush.bf16.msra.mxu0 %v159
    %179 = vmatpush.bf16.msra.mxu0 %v158
    %180 = vmatpush.bf16.msra.mxu0 %v157
    %181 = vmatmul.bf16.gmra.mxu0 %v104
    %v182 = vpop.f32.mrf.mxu0
    %v183 = vadd.f32 %v123, %v182
    %v184 = vpop.f32.mrf.mxu0
    %185 = vdwg.mxu0
    %vm186 = vcmp.gt.f32.partialorder %v183, 0.0
    %v187 = vmin.f32 %v183, 0.0
    %v188 = vmul.f32 %v187, 1.442695
    %v189 = vpow.pop %v188
    %v190 = vsub.f32 %v189, 1.0
    %v191 = vsel %vm186, %v183, %v190
    %v192 = vpack.c.bf16 %v191, %v191
    %s193 = scalar_lea.vmem [#allocation2], 64
    %v194 = vld [vmem:[%s193] sm:$0xf]
    %v195 = vld [vmem:[%s193 + $0x4] sm:$0xf]
    %v196 = vld [vmem:[%s193 + $0x8] sm:$0xf]
    %v197 = vld [vmem:[%s193 + $0xc] sm:$0xf]
    %v198 = vld [vmem:[%s193 + $0x10] sm:$0xf]
    %v199 = vld [vmem:[%s193 + $0x14] sm:$0xf]
    %v200 = vld [vmem:[%s193 + $0x18] sm:$0xf]
    %v201 = vld [vmem:[%s193 + $0x1c] sm:$0xf]
    %v202 = vld [vmem:[%s193 + $0x20] sm:$0xf]
    %v203 = vld [vmem:[%s193 + $0x24] sm:$0xf]
    %v204 = vld [vmem:[%s193 + $0x28] sm:$0xf]
    %v205 = vld [vmem:[%s193 + $0x2c] sm:$0xf]
    %v206 = vld [vmem:[%s193 + $0x30] sm:$0xf]
    %v207 = vld [vmem:[%s193 + $0x34] sm:$0xf]
    %v208 = vld [vmem:[%s193 + $0x38] sm:$0xf]
    %v209 = vld [vmem:[%s193 + $0x3c] sm:$0xf]
    %s210 = scalar_lea.vmem %s4, 1
    %v211 = vld [vmem:[%s210] sm:$0x1]
    %v213 = vperm.slane %v211, 0
    %v231 = vunpack.c.l.b16 %v194
    %v232 = vunpack.c.l.b16 %v195
    %v233 = vunpack.c.l.b16 %v196
    %v234 = vunpack.c.l.b16 %v197
    %v235 = vunpack.c.l.b16 %v198
    %v236 = vunpack.c.l.b16 %v199
    %v237 = vunpack.c.l.b16 %v200
    %v238 = vunpack.c.l.b16 %v201
    %v239 = vunpack.c.l.b16 %v202
    %v240 = vunpack.c.l.b16 %v203
    %v241 = vunpack.c.l.b16 %v204
    %v242 = vunpack.c.l.b16 %v205
    %v243 = vunpack.c.l.b16 %v206
    %v244 = vunpack.c.l.b16 %v207
    %v245 = vunpack.c.l.b16 %v208
    %v246 = vunpack.c.l.b16 %v209
    %v247 = vpack.c.b16 %v232, %v231
    %v248 = vpack.c.b16 %v234, %v233
    %v249 = vpack.c.b16 %v236, %v235
    %v250 = vpack.c.b16 %v238, %v237
    %v251 = vpack.c.b16 %v240, %v239
    %v252 = vpack.c.b16 %v242, %v241
    %v253 = vpack.c.b16 %v244, %v243
    %v254 = vpack.c.b16 %v246, %v245
    %263 = vmatpush.bf16.msra.mxu0 %v254
    %264 = vmatpush.bf16.msra.mxu0 %v253
    %265 = vmatpush.bf16.msra.mxu0 %v252
    %266 = vmatpush.bf16.msra.mxu0 %v251
    %267 = vmatpush.bf16.msra.mxu0 %v250
    %268 = vmatpush.bf16.msra.mxu0 %v249
    %269 = vmatpush.bf16.msra.mxu0 %v248
    %270 = vmatpush.bf16.msra.mxu0 %v247
    %271 = vmatmul.bf16.gmra.mxu0 %v192
    %v272 = vpop.f32.mrf.mxu0
    %v273 = vadd.f32 %v213, %v272
    %v274 = vpop.f32.mrf.mxu0
    %275 = vdwg.mxu0
    %vm276 = vcmp.gt.f32.partialorder %v273, 0.0
    %v277 = vmin.f32 %v273, 0.0
    %v278 = vmul.f32 %v277, 1.442695
    %v279 = vpow.pop %v278
    %v280 = vsub.f32 %v279, 1.0
    %v281 = vsel %vm276, %v273, %v280
    %v282 = vpack.c.bf16 %v281, %v281
    %s283 = scalar_lea.vmem [#allocation2], 128
    %v284 = vld [vmem:[%s283] sm:$0xf]
    %v285 = vld [vmem:[%s283 + $0x4] sm:$0xf]
    %v286 = vld [vmem:[%s283 + $0x8] sm:$0xf]
    %v287 = vld [vmem:[%s283 + $0xc] sm:$0xf]
    %v288 = vld [vmem:[%s283 + $0x10] sm:$0xf]
    %v289 = vld [vmem:[%s283 + $0x14] sm:$0xf]
    %v290 = vld [vmem:[%s283 + $0x18] sm:$0xf]
    %v291 = vld [vmem:[%s283 + $0x1c] sm:$0xf]
    %v292 = vld [vmem:[%s283 + $0x20] sm:$0xf]
    %v293 = vld [vmem:[%s283 + $0x24] sm:$0xf]
    %v294 = vld [vmem:[%s283 + $0x28] sm:$0xf]
    %v295 = vld [vmem:[%s283 + $0x2c] sm:$0xf]
    %v296 = vld [vmem:[%s283 + $0x30] sm:$0xf]
    %v297 = vld [vmem:[%s283 + $0x34] sm:$0xf]
    %v298 = vld [vmem:[%s283 + $0x38] sm:$0xf]
    %v299 = vld [vmem:[%s283 + $0x3c] sm:$0xf]
    %s300 = scalar_lea.vmem %s4, 2
    %v301 = vld [vmem:[%s300] sm:$0x1]
    %v303 = vperm.slane %v301, 0
    %v321 = vunpack.c.l.b16 %v284
    %v322 = vunpack.c.l.b16 %v285
    %v323 = vunpack.c.l.b16 %v286
    %v324 = vunpack.c.l.b16 %v287
    %v325 = vunpack.c.l.b16 %v288
    %v326 = vunpack.c.l.b16 %v289
    %v327 = vunpack.c.l.b16 %v290
    %v328 = vunpack.c.l.b16 %v291
    %v329 = vunpack.c.l.b16 %v292
    %v330 = vunpack.c.l.b16 %v293
    %v331 = vunpack.c.l.b16 %v294
    %v332 = vunpack.c.l.b16 %v295
    %v333 = vunpack.c.l.b16 %v296
    %v334 = vunpack.c.l.b16 %v297
    %v335 = vunpack.c.l.b16 %v298
    %v336 = vunpack.c.l.b16 %v299
    %v337 = vpack.c.b16 %v322, %v321
    %v338 = vpack.c.b16 %v324, %v323
    %v339 = vpack.c.b16 %v326, %v325
    %v340 = vpack.c.b16 %v328, %v327
    %v341 = vpack.c.b16 %v330, %v329
    %v342 = vpack.c.b16 %v332, %v331
    %v343 = vpack.c.b16 %v334, %v333
    %v344 = vpack.c.b16 %v336, %v335
    %353 = vmatpush.bf16.msra.mxu0 %v344
    %354 = vmatpush.bf16.msra.mxu0 %v343
    %355 = vmatpush.bf16.msra.mxu0 %v342
    %356 = vmatpush.bf16.msra.mxu0 %v341
    %357 = vmatpush.bf16.msra.mxu0 %v340
    %358 = vmatpush.bf16.msra.mxu0 %v339
    %359 = vmatpush.bf16.msra.mxu0 %v338
    %360 = vmatpush.bf16.msra.mxu0 %v337
    %361 = vmatmul.bf16.gmra.mxu0 %v282
    %v362 = vpop.f32.mrf.mxu0
    %v363 = vadd.f32 %v303, %v362
    %v364 = vpop.f32.mrf.mxu0
    %365 = vdwg.mxu0
    %vm366 = vcmp.gt.f32.partialorder %v363, 0.0
    %v367 = vmin.f32 %v363, 0.0
    %v368 = vmul.f32 %v367, 1.442695
    %v369 = vpow.pop %v368
    %v370 = vsub.f32 %v369, 1.0
    %v371 = vsel %vm366, %v363, %v370
    %v372 = vpack.c.bf16 %v371, %v371
    %v373 = vld [vmem:[#allocation4] sm:$0xf]
    %v374 = vld [vmem:[#allocation4 + $0x4] sm:$0xf]
    %v375 = vld [vmem:[#allocation4 + $0x8] sm:$0xf]
    %v376 = vld [vmem:[#allocation4 + $0xc] sm:$0xf]
    %v377 = vld [vmem:[#allocation4 + $0x10] sm:$0xf]
    %v378 = vld [vmem:[#allocation4 + $0x14] sm:$0xf]
    %v379 = vld [vmem:[#allocation4 + $0x18] sm:$0xf]
    %v380 = vld [vmem:[#allocation4 + $0x1c] sm:$0xf]
    %v381 = vld [vmem:[#allocation4 + $0x20] sm:$0xf]
    %v382 = vld [vmem:[#allocation4 + $0x24] sm:$0xf]
    %v383 = vld [vmem:[#allocation4 + $0x28] sm:$0xf]
    %v384 = vld [vmem:[#allocation4 + $0x2c] sm:$0xf]
    %v385 = vld [vmem:[#allocation4 + $0x30] sm:$0xf]
    %v386 = vld [vmem:[#allocation4 + $0x34] sm:$0xf]
    %v387 = vld [vmem:[#allocation4 + $0x38] sm:$0xf]
    %v388 = vld [vmem:[#allocation4 + $0x3c] sm:$0xf]
    %v389 = vld [vmem:[%s6] sm:$0x1]
    %v391 = vperm.slane %v389, 0
    %v409 = vunpack.c.l.b16 %v373
    %v410 = vunpack.c.l.b16 %v374
    %v411 = vunpack.c.l.b16 %v375
    %v412 = vunpack.c.l.b16 %v376
    %v413 = vunpack.c.l.b16 %v377
    %v414 = vunpack.c.l.b16 %v378
    %v415 = vunpack.c.l.b16 %v379
    %v416 = vunpack.c.l.b16 %v380
    %v417 = vunpack.c.l.b16 %v381
    %v418 = vunpack.c.l.b16 %v382
    %v419 = vunpack.c.l.b16 %v383
    %v420 = vunpack.c.l.b16 %v384
    %v421 = vunpack.c.l.b16 %v385
    %v422 = vunpack.c.l.b16 %v386
    %v423 = vunpack.c.l.b16 %v387
    %v424 = vunpack.c.l.b16 %v388
    %v425 = vpack.c.b16 %v410, %v409
    %v426 = vpack.c.b16 %v412, %v411
    %v427 = vpack.c.b16 %v414, %v413
    %v428 = vpack.c.b16 %v416, %v415
    %v429 = vpack.c.b16 %v418, %v417
    %v430 = vpack.c.b16 %v420, %v419
    %v431 = vpack.c.b16 %v422, %v421
    %v432 = vpack.c.b16 %v424, %v423
    %441 = vmatpush.bf16.msra.mxu0 %v432
    %442 = vmatpush.bf16.msra.mxu0 %v431
    %443 = vmatpush.bf16.msra.mxu0 %v430
    %444 = vmatpush.bf16.msra.mxu0 %v429
    %445 = vmatpush.bf16.msra.mxu0 %v428
    %446 = vmatpush.bf16.msra.mxu0 %v427
    %447 = vmatpush.bf16.msra.mxu0 %v426
    %448 = vmatpush.bf16.msra.mxu0 %v425
    %449 = vmatmul.bf16.gmra.mxu0 %v372
    %v450 = vpop.f32.mrf.mxu0
    %v451 = vadd.f32 %v391, %v450
    %v452 = vpop.f32.mrf.mxu0
    %453 = vdwg.mxu0
    %v454 = vlaneseq
    %v455 = vand.u32 %v454, 127
    %vm456 = vcmp.ge.s32.totalorder %v455, 20
    %vm457 = vcmp.lt.s32.totalorder %v455, 40
    %vm458 = vmand %vm456, %vm457
    %v459 = vmax.f32 %v451, 0.0
    %v460 = vand.u32 2147483647, %v451
    %v461 = vsub.f32 0.0, %v460
    %v462 = vmul.f32 %v461, 1.442695
    %v463 = vpow.pop %v462
    %v464 = vadd.f32 %v463, 1.0
    %v465 = vlog2.pop %v464
    %v466 = vmul.f32 %v465, 0.6931472
    %v467 = vmul.f32 -0.5, %v463
    %v468 = vadd.f32 %v467, 1.0
    %v469 = vmul.f32 %v468, %v463
    %v470 = vand.u32 2147483647, %v463
    %vm471 = vcmp.lt.f32.partialorder %v470, 0.0004427343
    %v472 = vsel %vm471, %v469, %v466
    %v473 = vadd.f32 %v459, %v472
    %v474 = vsel %vm458, %v473, %v451
    %475 = vst [vmem:[%s7] sm:$0xff] %v474
    // Predicated region
    $region38: #{_q_z_yx_forward_impl.1} parent=1 // pred_check
      _
    $region39: #{_q_z_yx_forward_impl.1} parent=1 // pred_check_branch
      %477 = sbr.rel (0) target = $region41
    $region40: #{_q_z_yx_forward_impl.1} parent=1 // pred_region
      _
    $region41: #{_q_z_yx_forward_impl.1} parent=1 // pred_fallthru
      _
    // Predicated region
    $region42: #{_q_z_yx_forward_impl.1} parent=1 // pred_check
      _
    $region43: #{_q_z_yx_forward_impl.1} parent=1 // pred_check_branch
      %479 = sbr.rel (0) target = $region45
    $region44: #{_q_z_yx_forward_impl.1} parent=1 // pred_region
      _
    $region45: #{_q_z_yx_forward_impl.1} parent=1 // pred_fallthru
      _
    %480 = vsyncpa [#allocation3], 1
    %481 = vsyncpa [#allocation5], 1

</llo_original>
